<compile_context>
chip_gen: v7x
topology: tpu7x:2x2x1
jax: 0.10.0
libtpu: 0.0.40
codegen_flags: <defaults>
</compile_context>

<pallas_src>
import functools
import math

import jax
import jax.numpy as jnp
from jax.experimental import pallas as pl
from jax.experimental.pallas import tpu as pltpu


def _round_up(a, m):
    return ((a + m - 1) // m) * m


def _pick_tile_rows(rows, out_lanes, io_itemsize, max_tile, budget_bytes, granule):
    """Largest row tile (multiple of `granule`) whose double-buffered blocks fit the budget."""
    io = max(int(io_itemsize), 1)
    # double-buffered x block (lane-padded to 128) + out block, plus ~2 f32-wide
    # elementwise temporaries of the output width.
    bytes_per_row = 2 * (128 + out_lanes) * max(io, 4) + 2 * out_lanes * 4
    t = budget_bytes // bytes_per_row
    t = min(t, max_tile)
    t = max(granule, (t // granule) * granule)
    # never larger than needed to cover all rows
    t = min(t, _round_up(rows, granule))
    # v7x: keep >= 2 grid steps when there is enough work so the "parallel"
    # row axis can shard across both TensorCores (no-op on v5e/v6e).
    if rows > granule:
        t = min(t, _round_up((rows + 1) // 2, granule))
    return max(granule, t)


def _packed_linear_kernel(x_ref, w_ref, b_ref, o_ref):
    # x_ref: (T, pack*5)  w_ref: (pack*5, 128) block-diagonal  b_ref: (1, 128)
    # o_ref: (T, 128) — single lane-dense accumulator and a single dense store.
    # The K=pack*5 contraction runs on the otherwise idle MXU, leaving the VPU free.
    # TODO(synk): pass precision=HIGHEST if bit-exact f32 matmul vs. PyTorch is required.
    acc = jnp.dot(x_ref[...], w_ref[...], preferred_element_type=jnp.float32)
    acc = acc + b_ref[...].astype(jnp.float32)
    o_ref[...] = acc.astype(o_ref.dtype)


def _linear_kernel(x_ref, w_ref, b_ref, o_ref, *, in_features):
    # x_ref: (T, 5)  w_ref: (5, e_tile)  b_ref: (1, e_tile)  o_ref: (T, e_tile)
    # e_tile >= 128 so every vreg op / store is already lane-dense.
    x = x_ref[...].astype(jnp.float32)
    w = w_ref[...].astype(jnp.float32)
    b = b_ref[...].astype(jnp.float32)
    acc = jnp.broadcast_to(b, (x.shape[0], w.shape[1]))   # hoisted once
    for k in range(in_features):                           # 5 unrolled VPU FMAs (K=5 starves the MXU)
        acc = acc + x[:, k:k + 1] * w[k:k + 1, :]
    o_ref[...] = acc.astype(o_ref.dtype)


def spatial_encoding(x, weight, bias, *, max_tile_rows=8192,
                     vmem_block_budget_bytes=16 * 1024 * 1024,
                     min_pallas_rows=16384):
    """Pallas equivalent of nn.Linear(5, embed_dim) applied to x of shape (..., 5).

    weight: (embed_dim, 5)  -- PyTorch convention
    bias:   (embed_dim,)
    """
    in_features = x.shape[-1]
    embed_dim = weight.shape[0]
    assert weight.shape == (embed_dim, in_features)
    assert bias.shape == (embed_dim,)

    leading = x.shape[:-1]
    n = int(math.prod(leading)) if leading else 1
    out_dtype = x.dtype

    # Small-n fast path: Pallas dispatch + grid overhead dominates tiny call
    # sites; plain XLA fusion wins there.
    if n < min_pallas_rows:
        out = jnp.einsum("...k,ek->...e", x, weight) + bias
        return out.astype(out_dtype)

    x2d = x.reshape(n, in_features)
    w_t = weight.T                        # (in_features, E)
    itemsize = jnp.dtype(out_dtype).itemsize
    granule = max(8, 32 // max(itemsize, 1))   # 8 / 16 / 32 sublanes for 4 / 2 / 1-byte out

    vmem_limit = 40 * 1024 * 1024         # < ~48 MiB guidance for v7x, plenty on v5e/v6e

    if embed_dim <= 64:
        # ---- Packed lane-dense path: `pack` logical rows per 128-lane output row.
        group = 1
        while group < embed_dim:          # smallest divisor of 128 >= embed_dim
            group *= 2
        pack = 128 // group

        # Pad rows only to a multiple of `pack` (<= pack-1 rows); the ragged
        # last grid block is handled by Pallas edge masking, not padding.
        n_pp = _round_up(n, pack)
        if n_pp != n:
            x2d = jnp.pad(x2d, ((0, n_pp - n), (0, 0)))
        rows = n_pp // pack
        x_packed = x2d.reshape(rows, pack * in_features)   # free row-major reshape

        w_grp, b_grp = w_t, bias
        if group != embed_dim:            # zero-pad each group to its lane width
            w_grp = jnp.pad(w_t, ((0, 0), (0, group - embed_dim)))
            b_grp = jnp.pad(bias, (0, group - embed_dim))
        w_bd = jnp.kron(jnp.eye(pack, dtype=w_grp.dtype), w_grp)   # (pack*5, 128) block-diag
        b_tiled = jnp.tile(b_grp, pack).reshape(1, 128)

        tile = _pick_tile_rows(rows, 128, itemsize, max_tile_rows,
                               vmem_block_budget_bytes, granule)
        grid = (pl.cdiv(rows, tile),)

        cost = pl.CostEstimate(
            flops=int(2 * rows * pack * in_features * 128),
            transcendentals=0,
            bytes_accessed=int(itemsize * (rows * pack * in_features
                                           + pack * in_features * 128 + 128
                                           + rows * 128)),
        )
        out_packed = pl.pallas_call(
            _packed_linear_kernel,
            out_shape=jax.ShapeDtypeStruct((rows, 128), out_dtype),
            grid=grid,
            in_specs=[
                pl.BlockSpec((tile, pack * in_features), lambda i: (i, 0)),
                pl.BlockSpec((pack * in_features, 128), lambda i: (0, 0)),
                pl.BlockSpec((1, 128), lambda i: (0, 0)),
            ],
            out_specs=pl.BlockSpec((tile, 128), lambda i: (i, 0)),
            compiler_params=pltpu.CompilerParams(
                dimension_semantics=("parallel",),
                vmem_limit_bytes=vmem_limit),
            cost_estimate=cost,
        )(x_packed, w_bd, b_tiled)

        out2d = out_packed.reshape(rows, pack, group)
        if group != embed_dim:
            out2d = out2d[..., :embed_dim]
        out2d = out2d.reshape(n_pp, embed_dim)
        if n_pp != n:
            out2d = out2d[:n]
    else:
        # ---- General path: lane-dense output width (multiple of 128), 2-D grid.
        e_pad = _round_up(embed_dim, 128)
        w_k, b_k = w_t, bias
        if e_pad != embed_dim:
            w_k = jnp.pad(w_t, ((0, 0), (0, e_pad - embed_dim)))
            b_k = jnp.pad(bias, (0, e_pad - embed_dim))
        b_k = b_k.reshape(1, e_pad)

        e_tile = e_pad if e_pad <= 2048 else 1024      # keep out blocks ~1-4 MiB
        tile = _pick_tile_rows(n, e_tile, itemsize, max_tile_rows,
                               vmem_block_budget_bytes, granule)
        grid = (pl.cdiv(n, tile), pl.cdiv(e_pad, e_tile))

        cost = pl.CostEstimate(
            flops=int(2 * n * in_features * e_pad),
            transcendentals=0,
            bytes_accessed=int(itemsize * (n * in_features * grid[1]
                                           + in_features * e_pad + e_pad
                                           + n * e_pad)),
        )
        kernel = functools.partial(_linear_kernel, in_features=in_features)
        out_pad = pl.pallas_call(
            kernel,
            out_shape=jax.ShapeDtypeStruct((n, e_pad), out_dtype),
            grid=grid,
            in_specs=[
                pl.BlockSpec((tile, in_features), lambda i, j: (i, 0)),
                pl.BlockSpec((in_features, e_tile), lambda i, j: (0, j)),
                pl.BlockSpec((1, e_tile), lambda i, j: (0, j)),
            ],
            out_specs=pl.BlockSpec((tile, e_tile), lambda i, j: (i, j)),
            compiler_params=pltpu.CompilerParams(
                dimension_semantics=("parallel", "parallel"),
                vmem_limit_bytes=vmem_limit),
            cost_estimate=cost,
        )(x2d, w_k, b_k)
        out2d = out_pad[:, :embed_dim] if e_pad != embed_dim else out_pad

    return out2d.reshape(*leading, embed_dim)


def _reference(x, weight, bias):
    # plain-JAX reference of nn.Linear: y = x @ W^T + b
    return jnp.einsum("...k,ek->...e", x, weight) + bias


if __name__ == "__main__":
    key = jax.random.PRNGKey(0)
    k_x, k_w, k_b, k_x2, k_w2, k_b2 = jax.random.split(key, 6)

    # Case 1 (module-faithful): bounding-box features (batch, seq, 5) -> E=32,
    # packed lane-dense MXU path.  Inputs are quantized to bf16-representable
    # f32 values so the tight tolerance holds regardless of how many MXU passes
    # the f32 matmul uses.
    embed_dim = 32
    batch, seq = 2, 8
    x = jax.random.normal(k_x, (batch, seq, 5), dtype=jnp.float32)
    weight = jax.random.normal(k_w, (embed_dim, 5), dtype=jnp.float32) * 0.1
    bias = jax.random.normal(k_b, (embed_dim,), dtype=jnp.float32) * 0.1
    x = x.astype(jnp.bfloat16).astype(jnp.float32)
    weight = weight.astype(jnp.bfloat16).astype(jnp.float32)
    bias = bias.astype(jnp.bfloat16).astype(jnp.float32)

    out = jax.block_until_ready(spatial_encoding(x, weight, bias, min_pallas_rows=0))
    ref = _reference(x, weight, bias)
    assert out.shape == (batch, seq, embed_dim)
    assert jnp.allclose(out, ref, atol=1e-5, rtol=1e-5)

    # Case 2: general (lane-dense, E=128) path with a ragged row count and a
    # small row-tile cap to exercise the multi-step grid + masked edge block.
    embed_dim2 = 128
    x2 = jax.random.normal(k_x2, (3, 70, 5), dtype=jnp.float32)
    weight2 = jax.random.normal(k_w2, (embed_dim2, 5), dtype=jnp.float32) * 0.1
    bias2 = jax.random.normal(k_b2, (embed_dim2,), dtype=jnp.float32) * 0.1
    out2 = jax.block_until_ready(
        spatial_encoding(x2, weight2, bias2, max_tile_rows=128, min_pallas_rows=0))
    ref2 = _reference(x2, weight2, bias2)
    assert out2.shape == (3, 70, embed_dim2)
    assert jnp.allclose(out2, ref2, atol=1e-5, rtol=1e-5)

    print("KERNEL_OK")
</pallas_src>

<mosaic_0001>
module attributes {stable_mosaic.version = 11 : i64} {
  func.func @_packed_linear_kernel(%arg0: i32, %arg1: memref<8x20xf32, #tpu.memory_space<vmem>>, %arg2: memref<20x128xf32, #tpu.memory_space<vmem>>, %arg3: memref<1x128xf32, #tpu.memory_space<vmem>>, %arg4: memref<8x128xf32, #tpu.memory_space<vmem>>) attributes {dimension_semantics = [#tpu.dimension_semantics<parallel>], iteration_bounds = array<i64: 1>, scalar_prefetch = 0 : i64, scratch_operands = 0 : i64, tpu.core_type = #tpu.core_type<tc>, window_params = [{transform_indices = @transform_0, window_bounds = array<i64: 8, 20>}, {pipeline_mode = #tpu.pipeline_mode<synchronous>, transform_indices = @transform_1, window_bounds = array<i64: 20, 128>}, {pipeline_mode = #tpu.pipeline_mode<synchronous>, transform_indices = @transform_2, window_bounds = array<i64: 1, 128>}, {transform_indices = @transform_3, window_bounds = array<i64: 8, 128>}]} {
    %c0 = arith.constant 0 : index
    %c0_0 = arith.constant 0 : index
    %0 = vector.load %arg1[%c0, %c0_0] : memref<8x20xf32, #tpu.memory_space<vmem>>, vector<8x20xf32>
    %c0_1 = arith.constant 0 : index
    %c0_2 = arith.constant 0 : index
    %1 = vector.load %arg2[%c0_1, %c0_2] : memref<20x128xf32, #tpu.memory_space<vmem>>, vector<20x128xf32>
    %cst = arith.constant dense<0.000000e+00> : vector<8x128xf32>
    %2 = tpu.matmul %0, %1, %cst {dimension_numbers = #tpu.dot_dimension_numbers<[1], [0], [0], [1], [0, 0, 1, 1], [], []>} : vector<8x20xf32>, vector<20x128xf32>, vector<8x128xf32> -> vector<8x128xf32>
    %c0_3 = arith.constant 0 : index
    %c0_4 = arith.constant 0 : index
    %3 = vector.load %arg3[%c0_3, %c0_4] : memref<1x128xf32, #tpu.memory_space<vmem>>, vector<1x128xf32>
    %4 = vector.broadcast %3 : vector<1x128xf32> to vector<8x128xf32>
    %5 = arith.addf %2, %4 : vector<8x128xf32>
    %c0_5 = arith.constant 0 : index
    %c0_6 = arith.constant 0 : index
    %6 = vector.load %arg4[%c0_5, %c0_6] : memref<8x128xf32, #tpu.memory_space<vmem>>, vector<8x128xf32>
    tpu.vector_store %arg4[%c0_5, %c0_6], %5 {strides = array<i32>} : memref<8x128xf32, #tpu.memory_space<vmem>>, vector<8x128xf32>,
    return
  }
  func.func @transform_0(%arg0: i32) -> (i32, i32) {
    %c0_i32 = arith.constant 0 : i32
    %c0_i32_0 = arith.constant 0 : i32
    return %arg0, %c0_i32 : i32, i32
  }
  func.func @transform_1(%arg0: i32) -> (i32, i32) {
    %c0_i32 = arith.constant 0 : i32
    %c0_i32_0 = arith.constant 0 : i32
    %c0_i32_1 = arith.constant 0 : i32
    return %c0_i32, %c0_i32_0 : i32, i32
  }
  func.func @transform_2(%arg0: i32) -> (i32, i32) {
    %c0_i32 = arith.constant 0 : i32
    %c0_i32_0 = arith.constant 0 : i32
    %c0_i32_1 = arith.constant 0 : i32
    return %c0_i32, %c0_i32_0 : i32, i32
  }
  func.func @transform_3(%arg0: i32) -> (i32, i32) {
    %c0_i32 = arith.constant 0 : i32
    %c0_i32_0 = arith.constant 0 : i32
    return %arg0, %c0_i32 : i32, i32
  }
}

</mosaic_0001>

<llo_original>
// kernel: tpu_custom_call.1
$region0: #{tpu_custom_call.1}
  #allocation0 [shape = 'u32[]', space=smem, size = 0x4, offset = 0x4, fixed_abs, tag = 'smem constant byte address 0x4 - core index']
  #allocation1 [shape = 'u32[144,128]{1,0:T(1,128)}', space=vmem, size = 0x12000, scoped, tag = 'internal scratch']
  %s0 = inlined_call_operand.hbm [shape: f32[4,20], index: 0, kind: input, shape index: {}]
  %s1 = inlined_call_operand.hbm [shape: f32[20,128], index: 1, kind: input, shape index: {}]
  %s2 = inlined_call_operand.vmem [shape: f32[1,128], index: 2, kind: input, shape index: {}]
  %s3 = inlined_call_operand.hbm [shape: f32[4,128], index: 3, kind: output, shape index: {}]
  %s4 = sld [smem:[#allocation0]]
  $region30: #{tpu_custom_call.1} parent=0
    _
  %s6 = ssub.s32 1, %s4
  %s7 = scalar_select 0, %s6, %s4
  $region1: #{tpu_custom_call.1} parent=0
    #allocation2 [shape = 'u8[4096]{0}', space=vmem, size = 0x1000, scoped, tag = 'input window, operand 0, single buffered']
    #allocation3 [shape = 's32[1]{0}', space=sflag, size = 0x4, scoped, tag = 'scoped memory for tpu_custom_call.1']
    #allocation4 [shape = 's32[1]{0}', space=sflag, size = 0x4, scoped, tag = 'scoped memory for tpu_custom_call.1']
    #allocation5 [shape = 'u8[12288]{0}', space=vmem, size = 0x3000, scoped, tag = 'input window, operand 1, single buffered']
    #allocation6 [shape = 's32[1]{0}', space=sflag, size = 0x4, scoped, tag = 'scoped memory for tpu_custom_call.1']
    #allocation7 [shape = 'u8[4096]{0}', space=vmem, size = 0x1000, scoped, tag = 'output window, operand 0, single buffered']
    %8 = vsyncpa [#allocation3], 0
    %9 = vsyncpa [#allocation6], 0
    %10 = vsyncpa [#allocation4], 0
    // Predicated region
    $region2: #{tpu_custom_call.1} parent=1 // pred_check
      _
    $region3: #{tpu_custom_call.1} parent=1 // pred_check_branch
      %12 = sbr.rel (0) target = $region5
    $region4: #{tpu_custom_call.1} parent=1 // pred_region
      %s14 = ssub.s32 128, 64
      %15 = vsyncadd [#allocation3], %s14
      %s16 = sshll.u32 [#allocation2], 4
      %s17 = int_to_ptr.vmem [resolvable:$true] %s16
      %22 = dma.hbm_to_vmem [thread:$0]  %s0, 64, %s17, [#allocation3], 64, 64, 4
    $region5: #{tpu_custom_call.1} parent=1 // pred_fallthru
      _
    // Predicated region
    $region6: #{tpu_custom_call.1} parent=1 // pred_check
      _
    $region7: #{tpu_custom_call.1} parent=1 // pred_check_branch
      %24 = sbr.rel (0) target = $region9
    $region8: #{tpu_custom_call.1} parent=1 // pred_region
      %s26 = ssub.s32 384, 384
      %27 = vsyncadd [#allocation6], %s26
      %s28 = sshll.u32 [#allocation5], 4
      %s29 = int_to_ptr.vmem [resolvable:$true] %s28
      %34 = dma.hbm_to_vmem [thread:$0]  %s1, 384, %s29, [#allocation6], 128, 128, 8
    $region9: #{tpu_custom_call.1} parent=1 // pred_fallthru
      _
    // Predicated region
    $region10: #{tpu_custom_call.1} parent=1 // pred_check
      _
    $region11: #{tpu_custom_call.1} parent=1 // pred_check_branch
      %36 = sbr.rel (0) target = $region13
    $region12: #{tpu_custom_call.1} parent=1 // pred_region
      _
    $region13: #{tpu_custom_call.1} parent=1 // pred_fallthru
      _
    // Predicated region
    $region14: #{tpu_custom_call.1} parent=1 // pred_check
      _
    $region15: #{tpu_custom_call.1} parent=1 // pred_check_branch
      %38 = sbr.rel (0) target = $region17
    $region16: #{tpu_custom_call.1} parent=1 // pred_region
      %39 = dma.done [#allocation3], 128
    $region17: #{tpu_custom_call.1} parent=1 // pred_fallthru
      _
    // Predicated region
    $region18: #{tpu_custom_call.1} parent=1 // pred_check
      _
    $region19: #{tpu_custom_call.1} parent=1 // pred_check_branch
      %41 = sbr.rel (0) target = $region21
    $region20: #{tpu_custom_call.1} parent=1 // pred_region
      %42 = dma.done [#allocation6], 384
    $region21: #{tpu_custom_call.1} parent=1 // pred_fallthru
      _
    %v43 = vld [vmem:[#allocation2] sm:$0xff]
    %v44 = vld [vmem:[#allocation5] sm:$0xff]
    %v45 = vld [vmem:[#allocation5 + $0x8] sm:$0xff]
    %v46 = vld [vmem:[#allocation5 + $0x10] sm:$0xf]
    %v47 = vld [vmem:[%s2] sm:$0x1]
    %v49 = vlaneseq
    %v50 = vshrl.u32 %v49, 7
    %v51 = vsub.s32 0, %v50
    %v52 = vrot.slane %v47, %v51
    %vm54 = vcmask 162816
    %v56 = vsel %vm54, %v43, 0
    %vm58 = vcmask 1043456
    %v60 = vsel %vm58, %v46, 0
    %62 = vmatprep.subr.mxu0 0.0
    %63 = vmatpush1.msra.mxu0 %v44
    %64 = vmatprep.subr.mxu0 0.0
    %65 = vmatpush1.msra.mxu0 %v45
    %66 = vmatprep.subr.mxu0 0.0
    %67 = vmatpush1.msra.mxu0 %v60
    %68 = vmatprep.subr.mxu0 0.0
    %69 = vmatpush1.msra.mxu0 0.0
    %70 = vmatprep.subr.mxu0 0.0
    %71 = vmatpush1.msra.mxu0 0.0
    %72 = vmatprep.subr.mxu0 0.0
    %73 = vmatpush1.msra.mxu0 0.0
    %74 = vmatprep.subr.mxu0 0.0
    %75 = vmatpush1.msra.mxu0 0.0
    %76 = vmatprep.subr.mxu0 0.0
    %77 = vmatpush1.msra.mxu0 0.0
    %78 = vmatprep.subr.mxu0 0.0
    %79 = vmatpush1.msra.mxu0 0.0
    %80 = vmatprep.subr.mxu0 0.0
    %81 = vmatpush1.msra.mxu0 0.0
    %82 = vmatprep.subr.mxu0 0.0
    %83 = vmatpush1.msra.mxu0 0.0
    %84 = vmatprep.subr.mxu0 0.0
    %85 = vmatpush1.msra.mxu0 0.0
    %86 = vmatprep.subr.mxu0 0.0
    %87 = vmatpush1.msra.mxu0 0.0
    %88 = vmatprep.subr.mxu0 0.0
    %89 = vmatpush1.msra.mxu0 0.0
    %90 = vmatprep.subr.mxu0 0.0
    %91 = vmatpush1.msra.mxu0 0.0
    %92 = vmatprep.subr.mxu0 0.0
    %93 = vmatpush1.msra.mxu0 0.0
    %94 = vmatprep.subr.mxu0 0.0
    %95 = vmatpush1.msra.mxu0 0.0
    %96 = vmatprep.subr.mxu0 0.0
    %97 = vmatpush1.msra.mxu0 0.0
    %98 = vmatprep.subr.mxu0 0.0
    %99 = vmatpush1.msra.mxu0 0.0
    %100 = vmatprep.subr.mxu0 0.0
    %101 = vmatpush1.msra.mxu0 0.0
    %102 = vmatprep.subr.mxu0 0.0
    %103 = vmatpush1.msra.mxu0 0.0
    %104 = vmatprep.subr.mxu0 0.0
    %105 = vmatpush1.msra.mxu0 0.0
    %106 = vmatprep.subr.mxu0 0.0
    %107 = vmatpush1.msra.mxu0 0.0
    %108 = vmatprep.subr.mxu0 0.0
    %109 = vmatpush1.msra.mxu0 0.0
    %110 = vmatprep.subr.mxu0 0.0
    %111 = vmatpush1.msra.mxu0 0.0
    %112 = vmatprep.subr.mxu0 0.0
    %113 = vmatpush1.msra.mxu0 0.0
    %114 = vmatprep.subr.mxu0 0.0
    %115 = vmatpush1.msra.mxu0 0.0
    %116 = vmatprep.subr.mxu0 0.0
    %117 = vmatpush1.msra.mxu0 0.0
    %118 = vmatprep.subr.mxu0 0.0
    %119 = vmatpush1.msra.mxu0 0.0
    %120 = vmatprep.subr.mxu0 0.0
    %121 = vmatpush1.msra.mxu0 0.0
    %122 = vmatprep.subr.mxu0 0.0
    %123 = vmatpush1.msra.mxu0 0.0
    %124 = vmatprep.subr.mxu0 0.0
    %125 = vmatpush1.msra.mxu0 0.0
    %126 = vmatprep.mubr.f32.mxu0 0.0
    %127 = vmatmul.mubr.f32.gmra.mrb[0].mxu0 %v56
    %v128 = vpop.f32.mrb[0].mxu0
    %v129 = vadd.f32 %v52, %v128
    %v130 = vpop.f32.mrb[0].mxu0
    %131 = vdwg.mxu0
    %132 = vst [vmem:[#allocation7] sm:$0xff] %v129
    // Predicated region
    $region22: #{tpu_custom_call.1} parent=1 // pred_check
      _
    $region23: #{tpu_custom_call.1} parent=1 // pred_check_branch
      %134 = sbr.rel (0) target = $region25
    $region24: #{tpu_custom_call.1} parent=1 // pred_region
      %s136 = ssub.s32 128, 64
      %137 = vsyncadd [#allocation4], %s136
      %s138 = sshll.u32 [#allocation7], 4
      %s139 = int_to_ptr.vmem [resolvable:$true] %s138
      %144 = dma.vmem_to_hbm [thread:$0]  %s139, 64, %s3, [#allocation4], 64, 64, 4
    $region25: #{tpu_custom_call.1} parent=1 // pred_fallthru
      _
    // Predicated region
    $region26: #{tpu_custom_call.1} parent=1 // pred_check
      _
    $region27: #{tpu_custom_call.1} parent=1 // pred_check_branch
      %146 = sbr.rel (0) target = $region29
    $region28: #{tpu_custom_call.1} parent=1 // pred_region
      %147 = dma.done [#allocation4], 128
    $region29: #{tpu_custom_call.1} parent=1 // pred_fallthru
      _
    %148 = vsyncpa [#allocation3], 1
    %149 = vsyncpa [#allocation6], 1
    %150 = vsyncpa [#allocation4], 1

</llo_original>
